<compile_context>
chip_gen: v6e
topology: v6e:2x2x1
jax: 0.10.0
libtpu: 0.0.40
codegen_flags: <defaults>
</compile_context>

<pallas_src>
import jax
import jax.numpy as jnp
from jax.experimental import pallas as pl
from jax.experimental.pallas import tpu as pltpu


def _mask_mul_kernel(mask_ref, x_ref, xm_ref):
    """mask_ref: (mrows, tc) batch/channel-shared expanded mask (x.dtype).
       x_ref:    (tr, tc) tile of the flattened (N*C, H*W) input.
       xm_ref:   (tr, tc) masked output tile."""
    x = x_ref[...]
    m = mask_ref[...]
    tr, tc = x.shape
    mr = m.shape[0]
    if mr == tr:
        xm_ref[...] = x * m
    elif mr == 1:
        xm_ref[...] = x * m  # implicit sublane broadcast (small-R fallback)
    else:
        # tr is a multiple of mr (the dtype sublane tile); the reshape is
        # layout-preserving, so the broadcast is per-vreg reuse, not XLU work.
        xm_ref[...] = (x.reshape(tr // mr, mr, tc) * m[None]).reshape(tr, tc)


def _sublane_multiple(dtype):
    """Minimum row-tile multiple for clean packed layouts / unmasked stores."""
    return {4: 8, 2: 16, 1: 32}.get(jnp.dtype(dtype).itemsize, 8)


def _choose_tiles(R, HW, itemsize, sub, target_bytes):
    """Pick (tr, tc) targeting ~target_bytes per input tile.

    Column tile: full HW when HW is not 128-aligned (layout rule: last block
    dim must be a multiple of 128 or the full extent), otherwise a multiple of
    128 capped so one sublane group stays in budget.  Row tile: full extent if
    small, else a multiple of the dtype sublane tile.
    """
    if HW % 128 != 0 or HW * sub * itemsize <= target_bytes:
        tc = HW
    else:
        max_lanes = max(128, (target_bytes // (sub * itemsize)) // 128 * 128)
        tc = min(HW, max_lanes)

    row_bytes = tc * itemsize
    max_rows = max(1, target_bytes // row_bytes)
    if R <= max_rows:
        tr = R
    else:
        tr = max(sub, (max_rows // sub) * sub)
        if tr > R:
            tr = R  # full extent (legal even when not a sublane multiple)
    return tr, tc


def patch_masker_forward(x, patch_mask, patch_size, *, return_mask=True,
                         full_mask=True, use_pallas=None,
                         target_tile_bytes=4 << 20):
    """x: (N, C, H, W); patch_mask: (ph*pw,) float (1.0 keep / 0.0 masked),
    batch-shared like the torch reference.  Returns (x_masked, mask) with mask
    in float32, or just x_masked if return_mask=False.  full_mask=False returns
    the (H, W) mask instead of materializing the (N, C, H, W) broadcast."""
    N, C, H, W = x.shape
    ph, pw = H // patch_size, W // patch_size
    # TODO(synk): adaptive_avg_pool2d is only an identity when H, W are
    # divisible by patch_size; the non-divisible resample path is unimplemented.
    assert ph * patch_size == H and pw * patch_size == W

    # Reference shares one randperm across the batch -> mask is batch-shared.
    if patch_mask.ndim == 2:
        patch_mask = patch_mask[0]
    pm2d = patch_mask.reshape(ph, pw).astype(jnp.float32)

    # Tiny expanded (H, W) mask (repeat_interleave equivalent), computed once.
    mask_hw = jnp.repeat(jnp.repeat(pm2d, patch_size, axis=0), patch_size, axis=1)

    R, HW = N * C, H * W
    itemsize = jnp.dtype(x.dtype).itemsize
    total_bytes = R * HW * itemsize

    if use_pallas is None:
        # A standalone pallas_call is a fusion barrier with fixed launch cost;
        # below a few MiB let XLA emit (and fuse) the broadcasted multiply.
        use_pallas = total_bytes >= (4 << 20)

    if not use_pallas:
        x_masked = x * mask_hw.astype(x.dtype)[None, None]
    else:
        sub = _sublane_multiple(x.dtype)
        tr, tc = _choose_tiles(R, HW, itemsize, sub, target_tile_bytes)
        nrt, nct = pl.cdiv(R, tr), pl.cdiv(HW, tc)

        # Guarantee >= 2 grid steps for large single-tile problems so megacore
        # (v7x: 2 TCs/chip) can shard this purely bandwidth-bound kernel.
        if nrt * nct == 1 and R >= 2 * sub:
            tr = max(sub, ((R // 2) // sub) * sub)
            nrt = pl.cdiv(R, tr)

        # Mask pre-replicated to the sublane-tile height -> vreg-to-vreg
        # multiply; 1-row fallback when tr is not a sublane multiple (tiny R).
        mrows = sub if (tr % sub == 0) else 1
        mask_rows = jnp.broadcast_to(
            mask_hw.reshape(1, HW).astype(x.dtype), (mrows, HW))

        x2 = x.reshape(R, HW)  # lane-dense (rows, H*W) layout

        tile_bytes = tr * tc * itemsize
        mask_bytes = mrows * tc * itemsize
        # Double-buffered input + output tiles, double-buffered mask, headroom.
        vmem_needed = 2 * (2 * tile_bytes) + 2 * mask_bytes + (2 << 20)
        vmem_limit = int(min(64 << 20, max(vmem_needed, 32 << 20)))

        # Column axis outermost: the shared-mask block index (0, j) only
        # changes when the column tile changes, so Pallas skips re-DMAing it
        # across the inner row loop.
        xm2 = pl.pallas_call(
            _mask_mul_kernel,
            grid=(nct, nrt),
            in_specs=[
                pl.BlockSpec((mrows, tc), lambda j, i: (0, j)),   # shared mask
                pl.BlockSpec((tr, tc), lambda j, i: (i, j)),      # input tile
            ],
            out_specs=pl.BlockSpec((tr, tc), lambda j, i: (i, j)),
            out_shape=jax.ShapeDtypeStruct((R, HW), x.dtype),
            compiler_params=pltpu.CompilerParams(
                dimension_semantics=("parallel", "parallel"),
                vmem_limit_bytes=vmem_limit),
        )(mask_rows, x2)
        x_masked = xm2.reshape(N, C, H, W)

    # TODO(synk): a PrefetchScalarGridSpec variant could skip HBM reads of
    # fully-masked patch rows (write zeros without reading) for a further
    # ~mask_ratio cut in read traffic; not implemented here.

    if not return_mask:
        return x_masked
    if not full_mask:
        return x_masked, mask_hw  # (H, W), float32 — consumer broadcasts
    # Reference returns the full (N, C, H, W) float mask.  Materializing it is
    # pure extra HBM traffic; prefer full_mask=False when the consumer allows.
    mask_full = jnp.broadcast_to(mask_hw[None, None, :, :], (N, C, H, W))
    return x_masked, mask_full


def make_patch_mask(key, ph, pw, mask_ratio):
    """Deterministic equivalent of the torch patch_mask construction: ones
    (ph*pw,) with `num_mask` randomly chosen patch indices zeroed (the same
    indices for every batch row, as in the reference)."""
    num_patches = ph * pw
    num_mask = int(num_patches * mask_ratio)
    perm = jax.random.permutation(key, num_patches)
    flat = jnp.ones((num_patches,), jnp.float32)
    flat = flat.at[perm[:num_mask]].set(0.0)
    return flat


if __name__ == "__main__":
    # Small shapes consistent with the module: N=2, C=4, H=W=16, patch_size=8.
    N, C, H, W = 2, 4, 16, 16
    patch_size = 8
    mask_ratio = 0.75
    ph, pw = H // patch_size, W // patch_size

    key = jax.random.PRNGKey(0)
    k_x, k_perm = jax.random.split(key)
    x = jax.random.normal(k_x, (N, C, H, W), dtype=jnp.float32)
    patch_mask = make_patch_mask(k_perm, ph, pw, mask_ratio)  # (ph*pw,)

    # Force the Pallas path so the kernel is exercised at this small size
    # (auto-dispatch would pick the fused XLA multiply here).
    x_masked, mask = patch_masker_forward(x, patch_mask, patch_size,
                                          use_pallas=True)
    jax.block_until_ready((x_masked, mask))

    # Pure-JAX reference (repeat_interleave + expand + mul).
    pm2d = patch_mask.reshape(ph, pw)
    mask_hw = jnp.repeat(jnp.repeat(pm2d, patch_size, axis=0),
                         patch_size, axis=1)
    mask_ref = jnp.broadcast_to(mask_hw[None, None, :, :],
                                (N, C, H, W)).astype(jnp.float32)
    assert mask.shape == (N, C, H, W) and mask.dtype == jnp.float32
    assert jnp.allclose(mask, mask_ref)
    assert jnp.allclose(x_masked, x * mask_ref.astype(x.dtype))

    print("KERNEL_OK")
</pallas_src>

<mosaic_0001>
module attributes {stable_mosaic.version = 11 : i64} {
  func.func @_mask_mul_kernel(%arg0: i32, %arg1: i32, %arg2: memref<8x256xf32, #tpu.memory_space<vmem>>, %arg3: memref<8x256xf32, #tpu.memory_space<vmem>>, %arg4: memref<8x256xf32, #tpu.memory_space<vmem>>) attributes {dimension_semantics = [#tpu.dimension_semantics<parallel>, #tpu.dimension_semantics<parallel>], iteration_bounds = array<i64: 1, 1>, scalar_prefetch = 0 : i64, scratch_operands = 0 : i64, tpu.core_type = #tpu.core_type<tc>, window_params = [{transform_indices = @transform_0, window_bounds = array<i64: 8, 256>}, {transform_indices = @transform_1, window_bounds = array<i64: 8, 256>}, {transform_indices = @transform_2, window_bounds = array<i64: 8, 256>}]} {
    %c0 = arith.constant 0 : index
    %c0_0 = arith.constant 0 : index
    %0 = vector.load %arg3[%c0, %c0_0] : memref<8x256xf32, #tpu.memory_space<vmem>>, vector<8x256xf32>
    %c0_1 = arith.constant 0 : index
    %c0_2 = arith.constant 0 : index
    %1 = vector.load %arg2[%c0_1, %c0_2] : memref<8x256xf32, #tpu.memory_space<vmem>>, vector<8x256xf32>
    %2 = arith.mulf %0, %1 : vector<8x256xf32>
    %c0_3 = arith.constant 0 : index
    %c0_4 = arith.constant 0 : index
    %3 = vector.load %arg4[%c0_3, %c0_4] : memref<8x256xf32, #tpu.memory_space<vmem>>, vector<8x256xf32>
    tpu.vector_store %arg4[%c0_3, %c0_4], %2 {strides = array<i32>} : memref<8x256xf32, #tpu.memory_space<vmem>>, vector<8x256xf32>,
    return
  }
  func.func @transform_0(%arg0: i32, %arg1: i32) -> (i32, i32) {
    %c0_i32 = arith.constant 0 : i32
    %c0_i32_0 = arith.constant 0 : i32
    return %c0_i32, %arg0 : i32, i32
  }
  func.func @transform_1(%arg0: i32, %arg1: i32) -> (i32, i32) {
    %c0_i32 = arith.constant 0 : i32
    return %arg1, %arg0 : i32, i32
  }
  func.func @transform_2(%arg0: i32, %arg1: i32) -> (i32, i32) {
    %c0_i32 = arith.constant 0 : i32
    return %arg1, %arg0 : i32, i32
  }
}

</mosaic_0001>

<llo_original>
// kernel: tpu_custom_call.1
$region0: #{tpu_custom_call.1}
  #allocation0 [shape = 'u32[]', space=smem, size = 0x4, offset = 0x4, fixed_abs, tag = 'smem constant byte address 0x4 - core index']
  #allocation1 [shape = 'u32[144,128]{1,0:T(1,128)}', space=vmem, size = 0x12000, scoped, tag = 'internal scratch']
  %s0 = inlined_call_operand.hbm [shape: f32[8,256], index: 0, kind: input, shape index: {}]
  %s1 = inlined_call_operand.hbm [shape: f32[8,256], index: 1, kind: input, shape index: {}]
  %s2 = inlined_call_operand.hbm [shape: f32[8,256], index: 2, kind: output, shape index: {}]
  %s3 = sld [smem:[#allocation0]]
  $region26: #{tpu_custom_call.1} parent=0
    _
  %s5 = ssub.s32 1, %s3
  %s6 = scalar_select 0, %s5, %s3
  $region1: #{tpu_custom_call.1} parent=0
    #allocation2 [shape = 'u8[8192]{0}', space=vmem, size = 0x2000, scoped, tag = 'input window, operand 0, single buffered']
    #allocation3 [shape = 's32[1]{0}', space=sflag, size = 0x4, scoped, tag = 'scoped memory for tpu_custom_call.1']
    #allocation4 [shape = 's32[1]{0}', space=sflag, size = 0x4, scoped, tag = 'scoped memory for tpu_custom_call.1']
    #allocation5 [shape = 'u8[8192]{0}', space=vmem, size = 0x2000, scoped, tag = 'input window, operand 1, single buffered']
    #allocation6 [shape = 's32[1]{0}', space=sflag, size = 0x4, scoped, tag = 'scoped memory for tpu_custom_call.1']
    #allocation7 [shape = 'u8[8192]{0}', space=vmem, size = 0x2000, scoped, tag = 'output window, operand 0, single buffered']
    %7 = vsyncpa [#allocation3], 0
    %8 = vsyncpa [#allocation6], 0
    %9 = vsyncpa [#allocation4], 0
    // Predicated region
    $region2: #{tpu_custom_call.1} parent=1 // pred_check
      _
    $region3: #{tpu_custom_call.1} parent=1 // pred_check_branch
      %11 = sbr.rel (0) target = $region5
    $region4: #{tpu_custom_call.1} parent=1 // pred_region
      %s13 = ssub.s32 256, 256
      %14 = vsyncadd [#allocation3], %s13
      %s16 = sshll.u32 [#allocation2], 4
      %s17 = int_to_ptr.vmem [resolvable:$true] %s16
      %19 = dma.hbm_to_vmem [thread:$0]  %s0, 256, %s17, [#allocation3]
    $region5: #{tpu_custom_call.1} parent=1 // pred_fallthru
      _
    // Predicated region
    $region6: #{tpu_custom_call.1} parent=1 // pred_check
      _
    $region7: #{tpu_custom_call.1} parent=1 // pred_check_branch
      %21 = sbr.rel (0) target = $region9
    $region8: #{tpu_custom_call.1} parent=1 // pred_region
      %s23 = ssub.s32 256, 256
      %24 = vsyncadd [#allocation6], %s23
      %s26 = sshll.u32 [#allocation5], 4
      %s27 = int_to_ptr.vmem [resolvable:$true] %s26
      %29 = dma.hbm_to_vmem [thread:$0]  %s1, 256, %s27, [#allocation6]
    $region9: #{tpu_custom_call.1} parent=1 // pred_fallthru
      _
    // Predicated region
    $region10: #{tpu_custom_call.1} parent=1 // pred_check
      _
    $region11: #{tpu_custom_call.1} parent=1 // pred_check_branch
      %31 = sbr.rel (0) target = $region13
    $region12: #{tpu_custom_call.1} parent=1 // pred_region
      %32 = dma.done [#allocation3], 256
    $region13: #{tpu_custom_call.1} parent=1 // pred_fallthru
      _
    // Predicated region
    $region14: #{tpu_custom_call.1} parent=1 // pred_check
      _
    $region15: #{tpu_custom_call.1} parent=1 // pred_check_branch
      %34 = sbr.rel (0) target = $region17
    $region16: #{tpu_custom_call.1} parent=1 // pred_region
      %35 = dma.done [#allocation6], 256
    $region17: #{tpu_custom_call.1} parent=1 // pred_fallthru
      _
    %v36 = vld [vmem:[#allocation5] sm:$0xff]
    %v37 = vld [vmem:[#allocation5 + $0x8] sm:$0xff]
    %v38 = vld [vmem:[#allocation2] sm:$0xff]
    %v39 = vld [vmem:[#allocation2 + $0x8] sm:$0xff]
    %v40 = vmul.f32 %v36, %v38
    %v41 = vmul.f32 %v37, %v39
    %42 = vst [vmem:[#allocation7] sm:$0xff] %v40
    %43 = vst [vmem:[#allocation7 + $0x8] sm:$0xff] %v41
    // Predicated region
    $region18: #{tpu_custom_call.1} parent=1 // pred_check
      _
    $region19: #{tpu_custom_call.1} parent=1 // pred_check_branch
      %45 = sbr.rel (0) target = $region21
    $region20: #{tpu_custom_call.1} parent=1 // pred_region
      %s47 = ssub.s32 256, 256
      %48 = vsyncadd [#allocation4], %s47
      %s50 = sshll.u32 [#allocation7], 4
      %s51 = int_to_ptr.vmem [resolvable:$true] %s50
      %53 = dma.vmem_to_hbm [thread:$0]  %s51, 256, %s2, [#allocation4]
    $region21: #{tpu_custom_call.1} parent=1 // pred_fallthru
      _
    // Predicated region
    $region22: #{tpu_custom_call.1} parent=1 // pred_check
      _
    $region23: #{tpu_custom_call.1} parent=1 // pred_check_branch
      %55 = sbr.rel (0) target = $region25
    $region24: #{tpu_custom_call.1} parent=1 // pred_region
      %56 = dma.done [#allocation4], 256
    $region25: #{tpu_custom_call.1} parent=1 // pred_fallthru
      _
    %57 = vsyncpa [#allocation3], 1
    %58 = vsyncpa [#allocation6], 1
    %59 = vsyncpa [#allocation4], 1

</llo_original>
